<compile_context>
chip_gen: v7x
topology: tpu7x:2x2x1
jax: 0.10.0
libtpu: 0.0.40
codegen_flags: <defaults>
</compile_context>

<pallas_src>
import jax
import jax.numpy as jnp
from jax.experimental import pallas as pl
from jax.experimental.pallas import tpu as pltpu

DIN, DH, DOUT = 2, 100, 1            # true PINN dims
DIN_P, DH_P = 8, 128                 # TPU-friendly padded dims
TM_MAX = 2048                        # max collocation points per grid step


def _cdiv(a, b):
    return (a + b - 1) // b


def pinn_kernel(x_ref, w1_ref, b1_ref, w2_ref, b2_ref, w3_ref, b3_ref,
                w4_ref, b4_ref, o_ref):
    # x_ref: (DIN_P, TM) feature-major block of collocation points (f32).
    x = x_ref[...]
    w1 = w1_ref[...]                                        # (DH_P, DIN_P) f32

    # Layer 1 (K=2): degenerate for the MXU -> broadcast FMAs on the VPU.
    z1 = w1[:, 0:1] * x[0:1, :] + w1[:, 1:2] * x[1:2, :] + b1_ref[...]
    h = jnp.tanh(z1)                                        # (DH_P, TM) f32

    # Layers 2/3: bf16 MXU operands, f32 accumulation, f32 bias + tanh.
    h = jnp.tanh(jnp.dot(w2_ref[...], h.astype(jnp.bfloat16),
                         preferred_element_type=jnp.float32) + b2_ref[...])
    h = jnp.tanh(jnp.dot(w3_ref[...], h.astype(jnp.bfloat16),
                         preferred_element_type=jnp.float32) + b3_ref[...])

    # Layer 4 (single output row): VPU multiply + sublane reduce (f32, exact --
    # padded feature rows of h are exactly zero).
    u = jnp.sum(w4_ref[...] * h, axis=0, keepdims=True)     # (1, TM)
    o_ref[...] = u + b4_ref[...]                            # lane-dense store


def _pad2d(a, rows, cols):
    a = a.astype(jnp.float32)
    return jnp.pad(a, ((0, rows - a.shape[0]), (0, cols - a.shape[1])))


def _has_two_tensorcores():
    """Best-effort detection of 2-TensorCore chips (v4 / v5p / v7x)."""
    try:
        kind = jax.devices()[0].device_kind.lower().replace(" ", "")
    except Exception:
        return False
    return any(tag in kind for tag in ("v7", "v4", "v5p"))


def _pick_tm(n128, two_tc):
    """n128: N rounded up to a multiple of 128."""
    if not two_tc:
        # Single TensorCore: one big step amortizes the ~0.35us/step overhead.
        return min(TM_MAX, n128)
    # Two TensorCores: an even number (>= 2) of equal-size "parallel" steps.
    steps = max(2, _cdiv(n128, TM_MAX))
    if steps % 2:
        steps += 1
    return max(128, _cdiv(_cdiv(n128, steps), 128) * 128)


def prepare_params(params):
    """Pad / cast weights once (hoist out of any hot loop when reused)."""
    (w1, b1), (w2, b2), (w3, b3), (w4, b4) = params
    return (
        _pad2d(w1, DH_P, DIN_P),                            # (128, 8)   f32
        _pad2d(b1[:, None], DH_P, 1),                       # (128, 1)   f32
        _pad2d(w2, DH_P, DH_P).astype(jnp.bfloat16),        # (128, 128) bf16
        _pad2d(b2[:, None], DH_P, 1),                       # (128, 1)   f32
        _pad2d(w3, DH_P, DH_P).astype(jnp.bfloat16),        # (128, 128) bf16
        _pad2d(b3[:, None], DH_P, 1),                       # (128, 1)   f32
        _pad2d(w4.T, DH_P, 1),                              # (128, 1)   f32
        b4.reshape(1, 1).astype(jnp.float32),               # (1, 1)     f32
    )


def pinn_forward(xy, params):
    """xy: [N, 2] float32 -> u: [N, 1] float32 (matches PyTorch PINN.forward)."""
    padded = prepare_params(params)
    N = xy.shape[0]
    n128 = _cdiv(N, 128) * 128
    tm = _pick_tm(n128, _has_two_tensorcores())
    n_pad = _cdiv(N, tm) * tm

    x_p = _pad2d(xy.T, DIN_P, n_pad)                        # (8, n_pad) feature-major

    const = lambda shape: pl.BlockSpec(shape, lambda i: (0, 0))
    out = pl.pallas_call(
        pinn_kernel,
        out_shape=jax.ShapeDtypeStruct((1, n_pad), jnp.float32),
        grid_spec=pltpu.PrefetchScalarGridSpec(
            num_scalar_prefetch=0,
            grid=(n_pad // tm,),
            in_specs=[
                pl.BlockSpec((DIN_P, tm), lambda i: (0, i)),   # x tile
                const((DH_P, DIN_P)), const((DH_P, 1)),        # W1, b1
                const((DH_P, DH_P)), const((DH_P, 1)),         # W2, b2
                const((DH_P, DH_P)), const((DH_P, 1)),         # W3, b3
                const((DH_P, 1)),    const((1, 1)),            # w4 col, b4
            ],
            out_specs=pl.BlockSpec((1, tm), lambda i: (0, i)),
        ),
        compiler_params=pltpu.CompilerParams(
            dimension_semantics=("parallel",)),
    )(x_p, *padded)

    return out[0, :N][:, None]


def init_params(key):
    """Deterministic init matching PyTorch nn.Linear (uniform +/- 1/sqrt(fan_in))."""
    dims = [(DH, DIN), (DH, DH), (DH, DH), (DOUT, DH)]
    params = []
    for (dout, din) in dims:
        key, kw, kb = jax.random.split(key, 3)
        bound = 1.0 / jnp.sqrt(din)
        w = jax.random.uniform(kw, (dout, din), jnp.float32, -bound, bound)
        b = jax.random.uniform(kb, (dout,), jnp.float32, -bound, bound)
        params.append((w, b))
    return params


def reference_forward(xy, params, bf16_hidden):
    """Pure-JAX reference.  bf16_hidden mirrors the kernel's mixed precision."""
    (w1, b1), (w2, b2), (w3, b3), (w4, b4) = params
    h = jnp.tanh(xy @ w1.T + b1)
    for (w, b) in ((w2, b2), (w3, b3)):
        if bf16_hidden:
            z = jnp.dot(h.astype(jnp.bfloat16), w.T.astype(jnp.bfloat16),
                        preferred_element_type=jnp.float32) + b
        else:
            z = h @ w.T + b
        h = jnp.tanh(z)
    return h @ w4.T + b4


if __name__ == "__main__":
    key = jax.random.PRNGKey(0)
    kparam, kx = jax.random.split(key)
    params = init_params(kparam)

    # N=256 is the PINN demo size; N=1000 exercises padding + the tiled grid.
    for N in (256, 1000):
        kx, kn = jax.random.split(kx)
        xy = jax.random.uniform(kn, (N, 2), jnp.float32, -1.0, 1.0)

        u = jax.block_until_ready(pinn_forward(xy, params))
        assert u.shape == (N, 1)

        u_mix = reference_forward(xy, params, bf16_hidden=True)
        u_f32 = reference_forward(xy, params, bf16_hidden=False)
        # Tight check vs a reference using the same mixed precision scheme.
        assert jnp.max(jnp.abs(u - u_mix)) < 1e-3, "mismatch vs mixed-precision reference"
        # Loose sanity check vs the full-f32 MLP (bf16 MXU operands -> ~1e-3..1e-2).
        assert jnp.max(jnp.abs(u - u_f32)) < 5e-2, "drifted too far from f32 reference"

    print("KERNEL_OK")
</pallas_src>

<mosaic_0001>
module attributes {stable_mosaic.version = 11 : i64} {
  func.func @pinn_kernel(%arg0: i32, %arg1: memref<8x256xf32, #tpu.memory_space<vmem>>, %arg2: memref<128x8xf32, #tpu.memory_space<vmem>>, %arg3: memref<128x1xf32, #tpu.memory_space<vmem>>, %arg4: memref<128x128xbf16, #tpu.memory_space<vmem>>, %arg5: memref<128x1xf32, #tpu.memory_space<vmem>>, %arg6: memref<128x128xbf16, #tpu.memory_space<vmem>>, %arg7: memref<128x1xf32, #tpu.memory_space<vmem>>, %arg8: memref<128x1xf32, #tpu.memory_space<vmem>>, %arg9: memref<1x1xf32, #tpu.memory_space<vmem>>, %arg10: memref<1x256xf32, #tpu.memory_space<vmem>>) attributes {dimension_semantics = [#tpu.dimension_semantics<parallel>], iteration_bounds = array<i64: 1>, scalar_prefetch = 0 : i64, scratch_operands = 0 : i64, tpu.core_type = #tpu.core_type<tc>, window_params = [{transform_indices = @transform_0, window_bounds = array<i64: 8, 256>}, {pipeline_mode = #tpu.pipeline_mode<synchronous>, transform_indices = @transform_1, window_bounds = array<i64: 128, 8>}, {pipeline_mode = #tpu.pipeline_mode<synchronous>, transform_indices = @transform_2, window_bounds = array<i64: 128, 1>}, {pipeline_mode = #tpu.pipeline_mode<synchronous>, transform_indices = @transform_3, window_bounds = array<i64: 128, 128>}, {pipeline_mode = #tpu.pipeline_mode<synchronous>, transform_indices = @transform_4, window_bounds = array<i64: 128, 1>}, {pipeline_mode = #tpu.pipeline_mode<synchronous>, transform_indices = @transform_5, window_bounds = array<i64: 128, 128>}, {pipeline_mode = #tpu.pipeline_mode<synchronous>, transform_indices = @transform_6, window_bounds = array<i64: 128, 1>}, {pipeline_mode = #tpu.pipeline_mode<synchronous>, transform_indices = @transform_7, window_bounds = array<i64: 128, 1>}, {pipeline_mode = #tpu.pipeline_mode<synchronous>, transform_indices = @transform_8, window_bounds = array<i64: 1, 1>}, {transform_indices = @transform_9, window_bounds = array<i64: 1, 256>}]} {
    %c0 = arith.constant 0 : index
    %c0_0 = arith.constant 0 : index
    %0 = vector.load %arg1[%c0, %c0_0] : memref<8x256xf32, #tpu.memory_space<vmem>>, vector<8x256xf32>
    %c0_1 = arith.constant 0 : index
    %c0_2 = arith.constant 0 : index
    %1 = vector.load %arg2[%c0_1, %c0_2] : memref<128x8xf32, #tpu.memory_space<vmem>>, vector<128x8xf32>
    %2 = vector.extract_strided_slice %1 {offsets = [0, 0], sizes = [128, 1], strides = [1, 1]} : vector<128x8xf32> to vector<128x1xf32>
    %3 = vector.extract_strided_slice %0 {offsets = [0, 0], sizes = [1, 256], strides = [1, 1]} : vector<8x256xf32> to vector<1x256xf32>
    %4 = vector.broadcast %2 : vector<128x1xf32> to vector<128x256xf32>
    %5 = vector.broadcast %3 : vector<1x256xf32> to vector<128x256xf32>
    %6 = arith.mulf %4, %5 : vector<128x256xf32>
    %7 = vector.extract_strided_slice %1 {offsets = [0, 1], sizes = [128, 1], strides = [1, 1]} : vector<128x8xf32> to vector<128x1xf32>
    %8 = vector.extract_strided_slice %0 {offsets = [1, 0], sizes = [1, 256], strides = [1, 1]} : vector<8x256xf32> to vector<1x256xf32>
    %9 = vector.broadcast %7 : vector<128x1xf32> to vector<128x256xf32>
    %10 = vector.broadcast %8 : vector<1x256xf32> to vector<128x256xf32>
    %11 = arith.mulf %9, %10 : vector<128x256xf32>
    %12 = arith.addf %6, %11 : vector<128x256xf32>
    %c0_3 = arith.constant 0 : index
    %c0_4 = arith.constant 0 : index
    %13 = vector.load %arg3[%c0_3, %c0_4] : memref<128x1xf32, #tpu.memory_space<vmem>>, vector<128x1xf32>
    %14 = vector.broadcast %13 : vector<128x1xf32> to vector<128x256xf32>
    %15 = arith.addf %12, %14 : vector<128x256xf32>
    %16 = math.tanh %15 : vector<128x256xf32>
    %c0_5 = arith.constant 0 : index
    %c0_6 = arith.constant 0 : index
    %17 = vector.load %arg4[%c0_5, %c0_6] : memref<128x128xbf16, #tpu.memory_space<vmem>>, vector<128x128xbf16>
    %18 = arith.truncf %16 : vector<128x256xf32> to vector<128x256xbf16>
    %cst = arith.constant dense<0.000000e+00> : vector<128x256xf32>
    %19 = tpu.matmul %17, %18, %cst {dimension_numbers = #tpu.dot_dimension_numbers<[1], [0], [0], [1], [0, 0, 1, 1], [], []>} : vector<128x128xbf16>, vector<128x256xbf16>, vector<128x256xf32> -> vector<128x256xf32>
    %c0_7 = arith.constant 0 : index
    %c0_8 = arith.constant 0 : index
    %20 = vector.load %arg5[%c0_7, %c0_8] : memref<128x1xf32, #tpu.memory_space<vmem>>, vector<128x1xf32>
    %21 = vector.broadcast %20 : vector<128x1xf32> to vector<128x256xf32>
    %22 = arith.addf %19, %21 : vector<128x256xf32>
    %23 = math.tanh %22 : vector<128x256xf32>
    %c0_9 = arith.constant 0 : index
    %c0_10 = arith.constant 0 : index
    %24 = vector.load %arg6[%c0_9, %c0_10] : memref<128x128xbf16, #tpu.memory_space<vmem>>, vector<128x128xbf16>
    %25 = arith.truncf %23 : vector<128x256xf32> to vector<128x256xbf16>
    %cst_11 = arith.constant dense<0.000000e+00> : vector<128x256xf32>
    %26 = tpu.matmul %24, %25, %cst_11 {dimension_numbers = #tpu.dot_dimension_numbers<[1], [0], [0], [1], [0, 0, 1, 1], [], []>} : vector<128x128xbf16>, vector<128x256xbf16>, vector<128x256xf32> -> vector<128x256xf32>
    %c0_12 = arith.constant 0 : index
    %c0_13 = arith.constant 0 : index
    %27 = vector.load %arg7[%c0_12, %c0_13] : memref<128x1xf32, #tpu.memory_space<vmem>>, vector<128x1xf32>
    %28 = vector.broadcast %27 : vector<128x1xf32> to vector<128x256xf32>
    %29 = arith.addf %26, %28 : vector<128x256xf32>
    %30 = math.tanh %29 : vector<128x256xf32>
    %c0_14 = arith.constant 0 : index
    %c0_15 = arith.constant 0 : index
    %31 = vector.load %arg8[%c0_14, %c0_15] : memref<128x1xf32, #tpu.memory_space<vmem>>, vector<128x1xf32>
    %32 = vector.broadcast %31 : vector<128x1xf32> to vector<128x256xf32>
    %33 = arith.mulf %32, %30 : vector<128x256xf32>
    %cst_16 = arith.constant dense<0.000000e+00> : vector<256xf32>
    %34 = vector.multi_reduction <add>, %33, %cst_16 [0] : vector<128x256xf32> to vector<256xf32>
    %35 = vector.shape_cast %34 : vector<256xf32> to vector<1x256xf32>
    %c0_17 = arith.constant 0 : index
    %c0_18 = arith.constant 0 : index
    %36 = vector.load %arg9[%c0_17, %c0_18] : memref<1x1xf32, #tpu.memory_space<vmem>>, vector<1x1xf32>
    %37 = vector.broadcast %36 : vector<1x1xf32> to vector<1x256xf32>
    %38 = arith.addf %35, %37 : vector<1x256xf32>
    %c0_19 = arith.constant 0 : index
    %c0_20 = arith.constant 0 : index
    %39 = vector.load %arg10[%c0_19, %c0_20] : memref<1x256xf32, #tpu.memory_space<vmem>>, vector<1x256xf32>
    tpu.vector_store %arg10[%c0_19, %c0_20], %38 {strides = array<i32>} : memref<1x256xf32, #tpu.memory_space<vmem>>, vector<1x256xf32>,
    return
  }
  func.func @transform_0(%arg0: i32) -> (i32, i32) {
    %c0_i32 = arith.constant 0 : i32
    %c0_i32_0 = arith.constant 0 : i32
    return %c0_i32, %arg0 : i32, i32
  }
  func.func @transform_1(%arg0: i32) -> (i32, i32) {
    %c0_i32 = arith.constant 0 : i32
    %c0_i32_0 = arith.constant 0 : i32
    %c0_i32_1 = arith.constant 0 : i32
    return %c0_i32, %c0_i32_0 : i32, i32
  }
  func.func @transform_2(%arg0: i32) -> (i32, i32) {
    %c0_i32 = arith.constant 0 : i32
    %c0_i32_0 = arith.constant 0 : i32
    %c0_i32_1 = arith.constant 0 : i32
    return %c0_i32, %c0_i32_0 : i32, i32
  }
  func.func @transform_3(%arg0: i32) -> (i32, i32) {
    %c0_i32 = arith.constant 0 : i32
    %c0_i32_0 = arith.constant 0 : i32
    %c0_i32_1 = arith.constant 0 : i32
    return %c0_i32, %c0_i32_0 : i32, i32
  }
  func.func @transform_4(%arg0: i32) -> (i32, i32) {
    %c0_i32 = arith.constant 0 : i32
    %c0_i32_0 = arith.constant 0 : i32
    %c0_i32_1 = arith.constant 0 : i32
    return %c0_i32, %c0_i32_0 : i32, i32
  }
  func.func @transform_5(%arg0: i32) -> (i32, i32) {
    %c0_i32 = arith.constant 0 : i32
    %c0_i32_0 = arith.constant 0 : i32
    %c0_i32_1 = arith.constant 0 : i32
    return %c0_i32, %c0_i32_0 : i32, i32
  }
  func.func @transform_6(%arg0: i32) -> (i32, i32) {
    %c0_i32 = arith.constant 0 : i32
    %c0_i32_0 = arith.constant 0 : i32
    %c0_i32_1 = arith.constant 0 : i32
    return %c0_i32, %c0_i32_0 : i32, i32
  }
  func.func @transform_7(%arg0: i32) -> (i32, i32) {
    %c0_i32 = arith.constant 0 : i32
    %c0_i32_0 = arith.constant 0 : i32
    %c0_i32_1 = arith.constant 0 : i32
    return %c0_i32, %c0_i32_0 : i32, i32
  }
  func.func @transform_8(%arg0: i32) -> (i32, i32) {
    %c0_i32 = arith.constant 0 : i32
    %c0_i32_0 = arith.constant 0 : i32
    %c0_i32_1 = arith.constant 0 : i32
    return %c0_i32, %c0_i32_0 : i32, i32
  }
  func.func @transform_9(%arg0: i32) -> (i32, i32) {
    %c0_i32 = arith.constant 0 : i32
    %c0_i32_0 = arith.constant 0 : i32
    return %c0_i32, %arg0 : i32, i32
  }
}

</mosaic_0001>

<llo_original>
// kernel: tpu_custom_call.1
$region0: #{tpu_custom_call.1}
  #allocation0 [shape = 'u32[]', space=smem, size = 0x4, offset = 0x4, fixed_abs, tag = 'smem constant byte address 0x4 - core index']
  #allocation1 [shape = 'u32[144,128]{1,0:T(1,128)}', space=vmem, size = 0x12000, scoped, tag = 'internal scratch']
  #allocation2 [shape = 'f32[1,1]{1,0:T(1,128)S(1)}', space=vmem, size = 0x200, scoped, tag = 'scoped memory for tpu_custom_call.1']
  %s0 = inlined_call_operand.vmem [shape: f32[8,256], index: 0, kind: input, shape index: {}]
  %s1 = inlined_call_operand.vmem [shape: f32[128,8], index: 1, kind: input, shape index: {}]
  %s2 = inlined_call_operand.vmem [shape: f32[128,1], index: 2, kind: input, shape index: {}]
  %s3 = inlined_call_operand.vmem [shape: bf16[128,128], index: 3, kind: input, shape index: {}]
  %s4 = inlined_call_operand.vmem [shape: f32[128,1], index: 4, kind: input, shape index: {}]
  %s5 = inlined_call_operand.vmem [shape: bf16[128,128], index: 5, kind: input, shape index: {}]
  %s6 = inlined_call_operand.vmem [shape: f32[128,1], index: 6, kind: input, shape index: {}]
  %s7 = inlined_call_operand.vmem [shape: f32[128,1], index: 7, kind: input, shape index: {}]
  %s8 = inlined_call_operand.<no memory space> [shape: f32[1,1], index: 8, kind: input, shape index: {}]
  %s9 = inlined_call_operand.hbm [shape: f32[1,256], index: 9, kind: output, shape index: {}]
  %s10 = sld [smem:[#allocation0]]
  $region46: #{tpu_custom_call.1} parent=0
    _
  %s12 = ssub.s32 1, %s10
  %s13 = scalar_select 0, %s12, %s10
  %v14 = vstv %s8
  %15 = vst [vmem:[#allocation2] sm:$0x1] %v14
  $region1: #{tpu_custom_call.1} parent=0
    #allocation3 [shape = 'u8[1024]{0}', space=vmem, size = 0x400, scoped, tag = 'output window, operand 0, single buffered']
    #allocation4 [shape = 's32[1]{0}', space=sflag, size = 0x4, scoped, tag = 'scoped memory for tpu_custom_call.1']
    %16 = vsyncpa [#allocation4], 0
    // Predicated region
    $region2: #{tpu_custom_call.1} parent=1 // pred_check
      _
    $region3: #{tpu_custom_call.1} parent=1 // pred_check_branch
      %18 = sbr.rel (0) target = $region5
    $region4: #{tpu_custom_call.1} parent=1 // pred_region
      _
    $region5: #{tpu_custom_call.1} parent=1 // pred_fallthru
      _
    // Predicated region
    $region6: #{tpu_custom_call.1} parent=1 // pred_check
      _
    $region7: #{tpu_custom_call.1} parent=1 // pred_check_branch
      %20 = sbr.rel (0) target = $region9
    $region8: #{tpu_custom_call.1} parent=1 // pred_region
      _
    $region9: #{tpu_custom_call.1} parent=1 // pred_fallthru
      _
    // Predicated region
    $region10: #{tpu_custom_call.1} parent=1 // pred_check
      _
    $region11: #{tpu_custom_call.1} parent=1 // pred_check_branch
      %22 = sbr.rel (0) target = $region13
    $region12: #{tpu_custom_call.1} parent=1 // pred_region
      _
    $region13: #{tpu_custom_call.1} parent=1 // pred_fallthru
      _
    // Predicated region
    $region14: #{tpu_custom_call.1} parent=1 // pred_check
      _
    $region15: #{tpu_custom_call.1} parent=1 // pred_check_branch
      %24 = sbr.rel (0) target = $region17
    $region16: #{tpu_custom_call.1} parent=1 // pred_region
      _
    $region17: #{tpu_custom_call.1} parent=1 // pred_fallthru
      _
    // Predicated region
    $region18: #{tpu_custom_call.1} parent=1 // pred_check
      _
    $region19: #{tpu_custom_call.1} parent=1 // pred_check_branch
      %26 = sbr.rel (0) target = $region21
    $region20: #{tpu_custom_call.1} parent=1 // pred_region
      _
    $region21: #{tpu_custom_call.1} parent=1 // pred_fallthru
      _
    // Predicated region
    $region22: #{tpu_custom_call.1} parent=1 // pred_check
      _
    $region23: #{tpu_custom_call.1} parent=1 // pred_check_branch
      %28 = sbr.rel (0) target = $region25
    $region24: #{tpu_custom_call.1} parent=1 // pred_region
      _
    $region25: #{tpu_custom_call.1} parent=1 // pred_fallthru
      _
    // Predicated region
    $region26: #{tpu_custom_call.1} parent=1 // pred_check
      _
    $region27: #{tpu_custom_call.1} parent=1 // pred_check_branch
      %30 = sbr.rel (0) target = $region29
    $region28: #{tpu_custom_call.1} parent=1 // pred_region
      _
    $region29: #{tpu_custom_call.1} parent=1 // pred_fallthru
      _
    // Predicated region
    $region30: #{tpu_custom_call.1} parent=1 // pred_check
      _
    $region31: #{tpu_custom_call.1} parent=1 // pred_check_branch
      %32 = sbr.rel (0) target = $region33
    $region32: #{tpu_custom_call.1} parent=1 // pred_region
      _
    $region33: #{tpu_custom_call.1} parent=1 // pred_fallthru
      _
    // Predicated region
    $region34: #{tpu_custom_call.1} parent=1 // pred_check
      _
    $region35: #{tpu_custom_call.1} parent=1 // pred_check_branch
      %34 = sbr.rel (0) target = $region37
    $region36: #{tpu_custom_call.1} parent=1 // pred_region
      _
    $region37: #{tpu_custom_call.1} parent=1 // pred_fallthru
      _
    %v36 = vld [vmem:[%s0] sm:$0xff]
    %v37 = vld [vmem:[%s0 + $0x8] sm:$0xff]
    %v38 = vld [vmem:[%s1] sm:$0xff]
    %v39 = vld [vmem:[%s1 + $0x8] sm:$0xff]
    %v40 = vld [vmem:[%s1 + $0x10] sm:$0xff]
    %v41 = vld [vmem:[%s1 + $0x18] sm:$0xff]
    %v42 = vld [vmem:[%s1 + $0x20] sm:$0xff]
    %v43 = vld [vmem:[%s1 + $0x28] sm:$0xff]
    %v44 = vld [vmem:[%s1 + $0x30] sm:$0xff]
    %v45 = vld [vmem:[%s1 + $0x38] sm:$0xff]
    %v46 = vld [vmem:[%s1 + $0x40] sm:$0xff]
    %v47 = vld [vmem:[%s1 + $0x48] sm:$0xff]
    %v48 = vld [vmem:[%s1 + $0x50] sm:$0xff]
    %v49 = vld [vmem:[%s1 + $0x58] sm:$0xff]
    %v50 = vld [vmem:[%s1 + $0x60] sm:$0xff]
    %v51 = vld [vmem:[%s1 + $0x68] sm:$0xff]
    %v52 = vld [vmem:[%s1 + $0x70] sm:$0xff]
    %v53 = vld [vmem:[%s1 + $0x78] sm:$0xff]
    %55 = vset.pattern.permute.xlu0 0
    %56 = vperm.xlu0 %55, %v38
    %v57 = vpop.permute.xlu0 %56
    %60 = vset.pattern.permute.xlu0 0
    %61 = vperm.xlu0 %60, %v39
    %v62 = vpop.permute.xlu0 %61
    %65 = vset.pattern.permute.xlu0 0
    %66 = vperm.xlu0 %65, %v40
    %v67 = vpop.permute.xlu0 %66
    %70 = vset.pattern.permute.xlu0 0
    %71 = vperm.xlu0 %70, %v41
    %v72 = vpop.permute.xlu0 %71
    %75 = vset.pattern.permute.xlu0 0
    %76 = vperm.xlu0 %75, %v42
    %v77 = vpop.permute.xlu0 %76
    %80 = vset.pattern.permute.xlu0 0
    %81 = vperm.xlu0 %80, %v43
    %v82 = vpop.permute.xlu0 %81
    %85 = vset.pattern.permute.xlu0 0
    %86 = vperm.xlu0 %85, %v44
    %v87 = vpop.permute.xlu0 %86
    %90 = vset.pattern.permute.xlu0 0
    %91 = vperm.xlu0 %90, %v45
    %v92 = vpop.permute.xlu0 %91
    %95 = vset.pattern.permute.xlu0 0
    %96 = vperm.xlu0 %95, %v46
    %v97 = vpop.permute.xlu0 %96
    %100 = vset.pattern.permute.xlu0 0
    %101 = vperm.xlu0 %100, %v47
    %v102 = vpop.permute.xlu0 %101
    %105 = vset.pattern.permute.xlu0 0
    %106 = vperm.xlu0 %105, %v48
    %v107 = vpop.permute.xlu0 %106
    %110 = vset.pattern.permute.xlu0 0
    %111 = vperm.xlu0 %110, %v49
    %v112 = vpop.permute.xlu0 %111
    %115 = vset.pattern.permute.xlu0 0
    %116 = vperm.xlu0 %115, %v50
    %v117 = vpop.permute.xlu0 %116
    %120 = vset.pattern.permute.xlu0 0
    %121 = vperm.xlu0 %120, %v51
    %v122 = vpop.permute.xlu0 %121
    %125 = vset.pattern.permute.xlu0 0
    %126 = vperm.xlu0 %125, %v52
    %v127 = vpop.permute.xlu0 %126
    %130 = vset.pattern.permute.xlu0 0
    %131 = vperm.xlu0 %130, %v53
    %v132 = vpop.permute.xlu0 %131
    %v134 = vlaneseq
    %v135 = vshrl.u32 %v134, 7
    %v136 = vsub.s32 0, %v135
    %v137 = vrot.slane %v36, %v136
    %v138 = vlaneseq
    %v139 = vshrl.u32 %v138, 7
    %v140 = vsub.s32 0, %v139
    %v141 = vrot.slane %v37, %v140
    %v142 = vmul.f32 %v57, %v137
    %v143 = vmul.f32 %v57, %v141
    %v144 = vmul.f32 %v62, %v137
    %v145 = vmul.f32 %v62, %v141
    %v146 = vmul.f32 %v67, %v137
    %v147 = vmul.f32 %v67, %v141
    %v148 = vmul.f32 %v72, %v137
    %v149 = vmul.f32 %v72, %v141
    %v150 = vmul.f32 %v77, %v137
    %v151 = vmul.f32 %v77, %v141
    %v152 = vmul.f32 %v82, %v137
    %v153 = vmul.f32 %v82, %v141
    %v154 = vmul.f32 %v87, %v137
    %v155 = vmul.f32 %v87, %v141
    %v156 = vmul.f32 %v92, %v137
    %v157 = vmul.f32 %v92, %v141
    %v158 = vmul.f32 %v97, %v137
    %v159 = vmul.f32 %v97, %v141
    %v160 = vmul.f32 %v102, %v137
    %v161 = vmul.f32 %v102, %v141
    %v162 = vmul.f32 %v107, %v137
    %v163 = vmul.f32 %v107, %v141
    %v164 = vmul.f32 %v112, %v137
    %v165 = vmul.f32 %v112, %v141
    %v166 = vmul.f32 %v117, %v137
    %v167 = vmul.f32 %v117, %v141
    %v168 = vmul.f32 %v122, %v137
    %v169 = vmul.f32 %v122, %v141
    %v170 = vmul.f32 %v127, %v137
    %v171 = vmul.f32 %v127, %v141
    %v172 = vmul.f32 %v132, %v137
    %v173 = vmul.f32 %v132, %v141
    %174 = vset.pattern.permute.xlu0 1
    %175 = vperm.xlu0 %174, %v38
    %v176 = vpop.permute.xlu0 %175
    %178 = vset.pattern.permute.xlu0 1
    %179 = vperm.xlu0 %178, %v39
    %v180 = vpop.permute.xlu0 %179
    %182 = vset.pattern.permute.xlu0 1
    %183 = vperm.xlu0 %182, %v40
    %v184 = vpop.permute.xlu0 %183
    %186 = vset.pattern.permute.xlu0 1
    %187 = vperm.xlu0 %186, %v41
    %v188 = vpop.permute.xlu0 %187
    %190 = vset.pattern.permute.xlu0 1
    %191 = vperm.xlu0 %190, %v42
    %v192 = vpop.permute.xlu0 %191
    %194 = vset.pattern.permute.xlu0 1
    %195 = vperm.xlu0 %194, %v43
    %v196 = vpop.permute.xlu0 %195
    %198 = vset.pattern.permute.xlu0 1
    %199 = vperm.xlu0 %198, %v44
    %v200 = vpop.permute.xlu0 %199
    %202 = vset.pattern.permute.xlu0 1
    %203 = vperm.xlu0 %202, %v45
    %v204 = vpop.permute.xlu0 %203
    %206 = vset.pattern.permute.xlu0 1
    %207 = vperm.xlu0 %206, %v46
    %v208 = vpop.permute.xlu0 %207
    %210 = vset.pattern.permute.xlu0 1
    %211 = vperm.xlu0 %210, %v47
    %v212 = vpop.permute.xlu0 %211
    %214 = vset.pattern.permute.xlu0 1
    %215 = vperm.xlu0 %214, %v48
    %v216 = vpop.permute.xlu0 %215
    %218 = vset.pattern.permute.xlu0 1
    %219 = vperm.xlu0 %218, %v49
    %v220 = vpop.permute.xlu0 %219
    %222 = vset.pattern.permute.xlu0 1
    %223 = vperm.xlu0 %222, %v50
    %v224 = vpop.permute.xlu0 %223
    %226 = vset.pattern.permute.xlu0 1
    %227 = vperm.xlu0 %226, %v51
    %v228 = vpop.permute.xlu0 %227
    %230 = vset.pattern.permute.xlu0 1
    %231 = vperm.xlu0 %230, %v52
    %v232 = vpop.permute.xlu0 %231
    %234 = vset.pattern.permute.xlu0 1
    %235 = vperm.xlu0 %234, %v53
    %v236 = vpop.permute.xlu0 %235
    %v238 = vlaneseq
    %v239 = vshrl.u32 %v238, 7
    %v240 = vsub.s32 1, %v239
    %v241 = vrot.slane %v36, %v240
    %v242 = vlaneseq
    %v243 = vshrl.u32 %v242, 7
    %v244 = vsub.s32 1, %v243
    %v245 = vrot.slane %v37, %v244
    %v246 = vmul.f32 %v176, %v241
    %v247 = vmul.f32 %v176, %v245
    %v248 = vmul.f32 %v180, %v241
    %v249 = vmul.f32 %v180, %v245
    %v250 = vmul.f32 %v184, %v241
    %v251 = vmul.f32 %v184, %v245
    %v252 = vmul.f32 %v188, %v241
    %v253 = vmul.f32 %v188, %v245
    %v254 = vmul.f32 %v192, %v241
    %v255 = vmul.f32 %v192, %v245
    %v256 = vmul.f32 %v196, %v241
    %v257 = vmul.f32 %v196, %v245
    %v258 = vmul.f32 %v200, %v241
    %v259 = vmul.f32 %v200, %v245
    %v260 = vmul.f32 %v204, %v241
    %v261 = vmul.f32 %v204, %v245
    %v262 = vmul.f32 %v208, %v241
    %v263 = vmul.f32 %v208, %v245
    %v264 = vmul.f32 %v212, %v241
    %v265 = vmul.f32 %v212, %v245
    %v266 = vmul.f32 %v216, %v241
    %v267 = vmul.f32 %v216, %v245
    %v268 = vmul.f32 %v220, %v241
    %v269 = vmul.f32 %v220, %v245
    %v270 = vmul.f32 %v224, %v241
    %v271 = vmul.f32 %v224, %v245
    %v272 = vmul.f32 %v228, %v241
    %v273 = vmul.f32 %v228, %v245
    %v274 = vmul.f32 %v232, %v241
    %v275 = vmul.f32 %v232, %v245
    %v276 = vmul.f32 %v236, %v241
    %v277 = vmul.f32 %v236, %v245
    %v278 = vadd.f32 %v142, %v246
    %v279 = vadd.f32 %v143, %v247
    %v280 = vadd.f32 %v144, %v248
    %v281 = vadd.f32 %v145, %v249
    %v282 = vadd.f32 %v146, %v250
    %v283 = vadd.f32 %v147, %v251
    %v284 = vadd.f32 %v148, %v252
    %v285 = vadd.f32 %v149, %v253
    %v286 = vadd.f32 %v150, %v254
    %v287 = vadd.f32 %v151, %v255
    %v288 = vadd.f32 %v152, %v256
    %v289 = vadd.f32 %v153, %v257
    %v290 = vadd.f32 %v154, %v258
    %v291 = vadd.f32 %v155, %v259
    %v292 = vadd.f32 %v156, %v260
    %v293 = vadd.f32 %v157, %v261
    %v294 = vadd.f32 %v158, %v262
    %v295 = vadd.f32 %v159, %v263
    %v296 = vadd.f32 %v160, %v264
    %v297 = vadd.f32 %v161, %v265
    %v298 = vadd.f32 %v162, %v266
    %v299 = vadd.f32 %v163, %v267
    %v300 = vadd.f32 %v164, %v268
    %v301 = vadd.f32 %v165, %v269
    %v302 = vadd.f32 %v166, %v270
    %v303 = vadd.f32 %v167, %v271
    %v304 = vadd.f32 %v168, %v272
    %v305 = vadd.f32 %v169, %v273
    %v306 = vadd.f32 %v170, %v274
    %v307 = vadd.f32 %v171, %v275
    %v308 = vadd.f32 %v172, %v276
    %v309 = vadd.f32 %v173, %v277
    %v310 = vld [vmem:[%s2] sm:$0xff]
    %v311 = vld [vmem:[%s2 + $0x8] sm:$0xff]
    %v312 = vld [vmem:[%s2 + $0x10] sm:$0xff]
    %v313 = vld [vmem:[%s2 + $0x18] sm:$0xff]
    %v314 = vld [vmem:[%s2 + $0x20] sm:$0xff]
    %v315 = vld [vmem:[%s2 + $0x28] sm:$0xff]
    %v316 = vld [vmem:[%s2 + $0x30] sm:$0xff]
    %v317 = vld [vmem:[%s2 + $0x38] sm:$0xff]
    %v318 = vld [vmem:[%s2 + $0x40] sm:$0xff]
    %v319 = vld [vmem:[%s2 + $0x48] sm:$0xff]
    %v320 = vld [vmem:[%s2 + $0x50] sm:$0xff]
    %v321 = vld [vmem:[%s2 + $0x58] sm:$0xff]
    %v322 = vld [vmem:[%s2 + $0x60] sm:$0xff]
    %v323 = vld [vmem:[%s2 + $0x68] sm:$0xff]
    %v324 = vld [vmem:[%s2 + $0x70] sm:$0xff]
    %v325 = vld [vmem:[%s2 + $0x78] sm:$0xff]
    %327 = vset.pattern.permute.xlu0 0
    %328 = vperm.xlu0 %327, %v310
    %v329 = vpop.permute.xlu0 %328
    %332 = vset.pattern.permute.xlu0 0
    %333 = vperm.xlu0 %332, %v311
    %v334 = vpop.permute.xlu0 %333
    %337 = vset.pattern.permute.xlu0 0
    %338 = vperm.xlu0 %337, %v312
    %v339 = vpop.permute.xlu0 %338
    %342 = vset.pattern.permute.xlu0 0
    %343 = vperm.xlu0 %342, %v313
    %v344 = vpop.permute.xlu0 %343
    %347 = vset.pattern.permute.xlu0 0
    %348 = vperm.xlu0 %347, %v314
    %v349 = vpop.permute.xlu0 %348
    %352 = vset.pattern.permute.xlu0 0
    %353 = vperm.xlu0 %352, %v315
    %v354 = vpop.permute.xlu0 %353
    %357 = vset.pattern.permute.xlu0 0
    %358 = vperm.xlu0 %357, %v316
    %v359 = vpop.permute.xlu0 %358
    %362 = vset.pattern.permute.xlu0 0
    %363 = vperm.xlu0 %362, %v317
    %v364 = vpop.permute.xlu0 %363
    %367 = vset.pattern.permute.xlu0 0
    %368 = vperm.xlu0 %367, %v318
    %v369 = vpop.permute.xlu0 %368
    %372 = vset.pattern.permute.xlu0 0
    %373 = vperm.xlu0 %372, %v319
    %v374 = vpop.permute.xlu0 %373
    %377 = vset.pattern.permute.xlu0 0
    %378 = vperm.xlu0 %377, %v320
    %v379 = vpop.permute.xlu0 %378
    %382 = vset.pattern.permute.xlu0 0
    %383 = vperm.xlu0 %382, %v321
    %v384 = vpop.permute.xlu0 %383
    %387 = vset.pattern.permute.xlu0 0
    %388 = vperm.xlu0 %387, %v322
    %v389 = vpop.permute.xlu0 %388
    %392 = vset.pattern.permute.xlu0 0
    %393 = vperm.xlu0 %392, %v323
    %v394 = vpop.permute.xlu0 %393
    %397 = vset.pattern.permute.xlu0 0
    %398 = vperm.xlu0 %397, %v324
    %v399 = vpop.permute.xlu0 %398
    %402 = vset.pattern.permute.xlu0 0
    %403 = vperm.xlu0 %402, %v325
    %v404 = vpop.permute.xlu0 %403
    %v406 = vadd.f32 %v278, %v329
    %v407 = vadd.f32 %v279, %v329
    %v408 = vadd.f32 %v280, %v334
    %v409 = vadd.f32 %v281, %v334
    %v410 = vadd.f32 %v282, %v339
    %v411 = vadd.f32 %v283, %v339
    %v412 = vadd.f32 %v284, %v344
    %v413 = vadd.f32 %v285, %v344
    %v414 = vadd.f32 %v286, %v349
    %v415 = vadd.f32 %v287, %v349
    %v416 = vadd.f32 %v288, %v354
    %v417 = vadd.f32 %v289, %v354
    %v418 = vadd.f32 %v290, %v359
    %v419 = vadd.f32 %v291, %v359
    %v420 = vadd.f32 %v292, %v364
    %v421 = vadd.f32 %v293, %v364
    %v422 = vadd.f32 %v294, %v369
    %v423 = vadd.f32 %v295, %v369
    %v424 = vadd.f32 %v296, %v374
    %v425 = vadd.f32 %v297, %v374
    %v426 = vadd.f32 %v298, %v379
    %v427 = vadd.f32 %v299, %v379
    %v428 = vadd.f32 %v300, %v384
    %v429 = vadd.f32 %v301, %v384
    %v430 = vadd.f32 %v302, %v389
    %v431 = vadd.f32 %v303, %v389
    %v432 = vadd.f32 %v304, %v394
    %v433 = vadd.f32 %v305, %v394
    %v434 = vadd.f32 %v306, %v399
    %v435 = vadd.f32 %v307, %v399
    %v436 = vadd.f32 %v308, %v404
    %v437 = vadd.f32 %v309, %v404
    %v438 = vtanh.pop %v406
    %v439 = vtanh.pop %v407
    %v440 = vtanh.pop %v408
    %v441 = vtanh.pop %v409
    %v442 = vtanh.pop %v410
    %v443 = vtanh.pop %v411
    %v444 = vtanh.pop %v412
    %v445 = vtanh.pop %v413
    %v446 = vtanh.pop %v414
    %v447 = vtanh.pop %v415
    %v448 = vtanh.pop %v416
    %v449 = vtanh.pop %v417
    %v450 = vtanh.pop %v418
    %v451 = vtanh.pop %v419
    %v452 = vtanh.pop %v420
    %v453 = vtanh.pop %v421
    %v454 = vtanh.pop %v422
    %v455 = vtanh.pop %v423
    %v456 = vtanh.pop %v424
    %v457 = vtanh.pop %v425
    %v458 = vtanh.pop %v426
    %v459 = vtanh.pop %v427
    %v460 = vtanh.pop %v428
    %v461 = vtanh.pop %v429
    %v462 = vtanh.pop %v430
    %v463 = vtanh.pop %v431
    %v464 = vtanh.pop %v432
    %v465 = vtanh.pop %v433
    %v466 = vtanh.pop %v434
    %v467 = vtanh.pop %v435
    %v468 = vtanh.pop %v436
    %v469 = vtanh.pop %v437
    %v470 = vld [vmem:[%s3] sm:$0xf]
    %v471 = vld [vmem:[%s3 + $0x4] sm:$0xf]
    %v472 = vld [vmem:[%s3 + $0x8] sm:$0xf]
    %v473 = vld [vmem:[%s3 + $0xc] sm:$0xf]
    %v474 = vld [vmem:[%s3 + $0x10] sm:$0xf]
    %v475 = vld [vmem:[%s3 + $0x14] sm:$0xf]
    %v476 = vld [vmem:[%s3 + $0x18] sm:$0xf]
    %v477 = vld [vmem:[%s3 + $0x1c] sm:$0xf]
    %v478 = vld [vmem:[%s3 + $0x20] sm:$0xf]
    %v479 = vld [vmem:[%s3 + $0x24] sm:$0xf]
    %v480 = vld [vmem:[%s3 + $0x28] sm:$0xf]
    %v481 = vld [vmem:[%s3 + $0x2c] sm:$0xf]
    %v482 = vld [vmem:[%s3 + $0x30] sm:$0xf]
    %v483 = vld [vmem:[%s3 + $0x34] sm:$0xf]
    %v484 = vld [vmem:[%s3 + $0x38] sm:$0xf]
    %v485 = vld [vmem:[%s3 + $0x3c] sm:$0xf]
    %v486 = vpack.c.bf16 %v440, %v438
    %v487 = vpack.c.bf16 %v441, %v439
    %v488 = vpack.c.bf16 %v444, %v442
    %v489 = vpack.c.bf16 %v445, %v443
    %v490 = vpack.c.bf16 %v448, %v446
    %v491 = vpack.c.bf16 %v449, %v447
    %v492 = vpack.c.bf16 %v452, %v450
    %v493 = vpack.c.bf16 %v453, %v451
    %v494 = vpack.c.bf16 %v456, %v454
    %v495 = vpack.c.bf16 %v457, %v455
    %v496 = vpack.c.bf16 %v460, %v458
    %v497 = vpack.c.bf16 %v461, %v459
    %v498 = vpack.c.bf16 %v464, %v462
    %v499 = vpack.c.bf16 %v465, %v463
    %v500 = vpack.c.bf16 %v468, %v466
    %v501 = vpack.c.bf16 %v469, %v467
    %v502 = vld [vmem:[%s4] sm:$0xff]
    %v503 = vld [vmem:[%s4 + $0x8] sm:$0xff]
    %v504 = vld [vmem:[%s4 + $0x10] sm:$0xff]
    %v505 = vld [vmem:[%s4 + $0x18] sm:$0xff]
    %v506 = vld [vmem:[%s4 + $0x20] sm:$0xff]
    %v507 = vld [vmem:[%s4 + $0x28] sm:$0xff]
    %v508 = vld [vmem:[%s4 + $0x30] sm:$0xff]
    %v509 = vld [vmem:[%s4 + $0x38] sm:$0xff]
    %v510 = vld [vmem:[%s4 + $0x40] sm:$0xff]
    %v511 = vld [vmem:[%s4 + $0x48] sm:$0xff]
    %v512 = vld [vmem:[%s4 + $0x50] sm:$0xff]
    %v513 = vld [vmem:[%s4 + $0x58] sm:$0xff]
    %v514 = vld [vmem:[%s4 + $0x60] sm:$0xff]
    %v515 = vld [vmem:[%s4 + $0x68] sm:$0xff]
    %v516 = vld [vmem:[%s4 + $0x70] sm:$0xff]
    %v517 = vld [vmem:[%s4 + $0x78] sm:$0xff]
    %519 = vset.pattern.permute.xlu0 0
    %520 = vperm.xlu0 %519, %v502
    %v521 = vpop.permute.xlu0 %520
    %524 = vset.pattern.permute.xlu0 0
    %525 = vperm.xlu0 %524, %v503
    %v526 = vpop.permute.xlu0 %525
    %529 = vset.pattern.permute.xlu0 0
    %530 = vperm.xlu0 %529, %v504
    %v531 = vpop.permute.xlu0 %530
    %534 = vset.pattern.permute.xlu0 0
    %535 = vperm.xlu0 %534, %v505
    %v536 = vpop.permute.xlu0 %535
    %539 = vset.pattern.permute.xlu0 0
    %540 = vperm.xlu0 %539, %v506
    %v541 = vpop.permute.xlu0 %540
    %544 = vset.pattern.permute.xlu0 0
    %545 = vperm.xlu0 %544, %v507
    %v546 = vpop.permute.xlu0 %545
    %549 = vset.pattern.permute.xlu0 0
    %550 = vperm.xlu0 %549, %v508
    %v551 = vpop.permute.xlu0 %550
    %554 = vset.pattern.permute.xlu0 0
    %555 = vperm.xlu0 %554, %v509
    %v556 = vpop.permute.xlu0 %555
    %559 = vset.pattern.permute.xlu0 0
    %560 = vperm.xlu0 %559, %v510
    %v561 = vpop.permute.xlu0 %560
    %564 = vset.pattern.permute.xlu0 0
    %565 = vperm.xlu0 %564, %v511
    %v566 = vpop.permute.xlu0 %565
    %569 = vset.pattern.permute.xlu0 0
    %570 = vperm.xlu0 %569, %v512
    %v571 = vpop.permute.xlu0 %570
    %574 = vset.pattern.permute.xlu0 0
    %575 = vperm.xlu0 %574, %v513
    %v576 = vpop.permute.xlu0 %575
    %579 = vset.pattern.permute.xlu0 0
    %580 = vperm.xlu0 %579, %v514
    %v581 = vpop.permute.xlu0 %580
    %584 = vset.pattern.permute.xlu0 0
    %585 = vperm.xlu0 %584, %v515
    %v586 = vpop.permute.xlu0 %585
    %589 = vset.pattern.permute.xlu0 0
    %590 = vperm.xlu0 %589, %v516
    %v591 = vpop.permute.xlu0 %590
    %594 = vset.pattern.permute.xlu0 0
    %595 = vperm.xlu0 %594, %v517
    %v596 = vpop.permute.xlu0 %595
    %v614 = vunpack.c.l.b16 %v470
    %v615 = vunpack.c.l.b16 %v471
    %v616 = vunpack.c.l.b16 %v472
    %v617 = vunpack.c.l.b16 %v473
    %v618 = vunpack.c.l.b16 %v474
    %v619 = vunpack.c.l.b16 %v475
    %v620 = vunpack.c.l.b16 %v476
    %v621 = vunpack.c.l.b16 %v477
    %v622 = vunpack.c.l.b16 %v478
    %v623 = vunpack.c.l.b16 %v479
    %v624 = vunpack.c.l.b16 %v480
    %v625 = vunpack.c.l.b16 %v481
    %v626 = vunpack.c.l.b16 %v482
    %v627 = vunpack.c.l.b16 %v483
    %v628 = vunpack.c.l.b16 %v484
    %v629 = vunpack.c.l.b16 %v485
    %v630 = vpack.c.b16 %v615, %v614
    %v631 = vpack.c.b16 %v617, %v616
    %v632 = vpack.c.b16 %v619, %v618
    %v633 = vpack.c.b16 %v621, %v620
    %v634 = vpack.c.b16 %v623, %v622
    %v635 = vpack.c.b16 %v625, %v624
    %v636 = vpack.c.b16 %v627, %v626
    %v637 = vpack.c.b16 %v629, %v628
    %646 = vmatprep.subr.bf16.mxu0 %v487
    %647 = vmatpush1.bf16.msra.mxu0 %v486
    %648 = vmatprep.subr.bf16.mxu0 %v489
    %649 = vmatpush1.bf16.msra.mxu0 %v488
    %650 = vmatprep.subr.bf16.mxu0 %v491
    %651 = vmatpush1.bf16.msra.mxu0 %v490
    %652 = vmatprep.subr.bf16.mxu0 %v493
    %653 = vmatpush1.bf16.msra.mxu0 %v492
    %654 = vmatprep.subr.bf16.mxu0 %v495
    %655 = vmatpush1.bf16.msra.mxu0 %v494
    %656 = vmatprep.subr.bf16.mxu0 %v497
    %657 = vmatpush1.bf16.msra.mxu0 %v496
    %658 = vmatprep.subr.bf16.mxu0 %v499
    %659 = vmatpush1.bf16.msra.mxu0 %v498
    %660 = vmatprep.subr.bf16.mxu0 %v501
    %661 = vmatpush1.bf16.msra.mxu0 %v500
    %662 = vmatprep.subr.bf16.mxu0 0
    %663 = vmatpush1.bf16.msra.mxu0 0
    %664 = vmatprep.subr.bf16.mxu0 0
    %665 = vmatpush1.bf16.msra.mxu0 0
    %666 = vmatprep.subr.bf16.mxu0 0
    %667 = vmatpush1.bf16.msra.mxu0 0
    %668 = vmatprep.subr.bf16.mxu0 0
    %669 = vmatpush1.bf16.msra.mxu0 0
    %670 = vmatprep.subr.bf16.mxu0 0
    %671 = vmatpush1.bf16.msra.mxu0 0
    %672 = vmatprep.subr.bf16.mxu0 0
    %673 = vmatpush1.bf16.msra.mxu0 0
    %674 = vmatprep.subr.bf16.mxu0 0
    %675 = vmatpush1.bf16.msra.mxu0 0
    %676 = vmatprep.subr.bf16.mxu0 0
    %677 = vmatpush1.bf16.msra.mxu0 0
    %678 = vmatprep.mubr.bf16.mxu0 0
    %679 = vmatmul.mubr.bf16.gmra.mrb[0].mxu0 %v630
    %v680 = vpop.f32.mrb[0].mxu0
    %v681 = vadd.f32 %v521, %v680
    %v682 = vpop.f32.mrb[0].mxu0
    %v683 = vadd.f32 %v521, %v682
    %v684 = vpop.f32.mrb[0].mxu0
    %v685 = vadd.f32 %v526, %v684
    %v686 = vpop.f32.mrb[0].mxu0
    %v687 = vadd.f32 %v526, %v686
    %688 = vmatprep.mubr.bf16.mxu0 0
    %689 = vmatmul.mubr.bf16.gmra.mrb[0].mxu0 %v631
    %v690 = vpop.f32.mrb[0].mxu0
    %v691 = vadd.f32 %v531, %v690
    %v692 = vpop.f32.mrb[0].mxu0
    %v693 = vadd.f32 %v531, %v692
    %v694 = vpop.f32.mrb[0].mxu0
    %v695 = vadd.f32 %v536, %v694
    %v696 = vpop.f32.mrb[0].mxu0
    %v697 = vadd.f32 %v536, %v696
    %698 = vmatprep.mubr.bf16.mxu0 0
    %699 = vmatmul.mubr.bf16.gmra.mrb[0].mxu0 %v632
    %v700 = vpop.f32.mrb[0].mxu0
    %v701 = vadd.f32 %v541, %v700
    %v702 = vpop.f32.mrb[0].mxu0
    %v703 = vadd.f32 %v541, %v702
    %v704 = vpop.f32.mrb[0].mxu0
    %v705 = vadd.f32 %v546, %v704
    %v706 = vpop.f32.mrb[0].mxu0
    %v707 = vadd.f32 %v546, %v706
    %708 = vmatprep.mubr.bf16.mxu0 0
    %709 = vmatmul.mubr.bf16.gmra.mrb[0].mxu0 %v633
    %v710 = vpop.f32.mrb[0].mxu0
    %v711 = vadd.f32 %v551, %v710
    %v712 = vpop.f32.mrb[0].mxu0
    %v713 = vadd.f32 %v551, %v712
    %v714 = vpop.f32.mrb[0].mxu0
    %v715 = vadd.f32 %v556, %v714
    %v716 = vpop.f32.mrb[0].mxu0
    %v717 = vadd.f32 %v556, %v716
    %718 = vmatprep.mubr.bf16.mxu0 0
    %719 = vmatmul.mubr.bf16.gmra.mrb[0].mxu0 %v634
    %v720 = vpop.f32.mrb[0].mxu0
    %v721 = vadd.f32 %v561, %v720
    %v722 = vpop.f32.mrb[0].mxu0
    %v723 = vadd.f32 %v561, %v722
    %v724 = vpop.f32.mrb[0].mxu0
    %v725 = vadd.f32 %v566, %v724
    %v726 = vpop.f32.mrb[0].mxu0
    %v727 = vadd.f32 %v566, %v726
    %728 = vmatprep.mubr.bf16.mxu0 0
    %729 = vmatmul.mubr.bf16.gmra.mrb[0].mxu0 %v635
    %v730 = vpop.f32.mrb[0].mxu0
    %v731 = vadd.f32 %v571, %v730
    %v732 = vpop.f32.mrb[0].mxu0
    %v733 = vadd.f32 %v571, %v732
    %v734 = vpop.f32.mrb[0].mxu0
    %v735 = vadd.f32 %v576, %v734
    %v736 = vpop.f32.mrb[0].mxu0
    %v737 = vadd.f32 %v576, %v736
    %738 = vmatprep.mubr.bf16.mxu0 0
    %739 = vmatmul.mubr.bf16.gmra.mrb[0].mxu0 %v636
    %v740 = vpop.f32.mrb[0].mxu0
    %v741 = vadd.f32 %v581, %v740
    %v742 = vpop.f32.mrb[0].mxu0
    %v743 = vadd.f32 %v581, %v742
    %v744 = vpop.f32.mrb[0].mxu0
    %v745 = vadd.f32 %v586, %v744
    %v746 = vpop.f32.mrb[0].mxu0
    %v747 = vadd.f32 %v586, %v746
    %748 = vmatprep.mubr.bf16.mxu0 0
    %749 = vmatmul.mubr.bf16.gmra.mrb[0].mxu0 %v637
    %v750 = vpop.f32.mrb[0].mxu0
    %v751 = vadd.f32 %v591, %v750
    %v752 = vpop.f32.mrb[0].mxu0
    %v753 = vadd.f32 %v591, %v752
    %v754 = vpop.f32.mrb[0].mxu0
    %v755 = vadd.f32 %v596, %v754
    %v756 = vpop.f32.mrb[0].mxu0
    %v757 = vadd.f32 %v596, %v756
    %758 = vdwg.mxu0
    %v759 = vtanh.pop %v681
    %v760 = vtanh.pop %v683
    %v761 = vtanh.pop %v685
    %v762 = vtanh.pop %v687
    %v763 = vtanh.pop %v691
    %v764 = vtanh.pop %v693
    %v765 = vtanh.pop %v695
    %v766 = vtanh.pop %v697
    %v767 = vtanh.pop %v701
    %v768 = vtanh.pop %v703
    %v769 = vtanh.pop %v705
    %v770 = vtanh.pop %v707
    %v771 = vtanh.pop %v711
    %v772 = vtanh.pop %v713
    %v773 = vtanh.pop %v715
    %v774 = vtanh.pop %v717
    %v775 = vtanh.pop %v721
    %v776 = vtanh.pop %v723
    %v777 = vtanh.pop %v725
    %v778 = vtanh.pop %v727
    %v779 = vtanh.pop %v731
    %v780 = vtanh.pop %v733
    %v781 = vtanh.pop %v735
    %v782 = vtanh.pop %v737
    %v783 = vtanh.pop %v741
    %v784 = vtanh.pop %v743
    %v785 = vtanh.pop %v745
    %v786 = vtanh.pop %v747
    %v787 = vtanh.pop %v751
    %v788 = vtanh.pop %v753
    %v789 = vtanh.pop %v755
    %v790 = vtanh.pop %v757
    %v791 = vld [vmem:[%s5] sm:$0xf]
    %v792 = vld [vmem:[%s5 + $0x4] sm:$0xf]
    %v793 = vld [vmem:[%s5 + $0x8] sm:$0xf]
    %v794 = vld [vmem:[%s5 + $0xc] sm:$0xf]
    %v795 = vld [vmem:[%s5 + $0x10] sm:$0xf]
    %v796 = vld [vmem:[%s5 + $0x14] sm:$0xf]
    %v797 = vld [vmem:[%s5 + $0x18] sm:$0xf]
    %v798 = vld [vmem:[%s5 + $0x1c] sm:$0xf]
    %v799 = vld [vmem:[%s5 + $0x20] sm:$0xf]
    %v800 = vld [vmem:[%s5 + $0x24] sm:$0xf]
    %v801 = vld [vmem:[%s5 + $0x28] sm:$0xf]
    %v802 = vld [vmem:[%s5 + $0x2c] sm:$0xf]
    %v803 = vld [vmem:[%s5 + $0x30] sm:$0xf]
    %v804 = vld [vmem:[%s5 + $0x34] sm:$0xf]
    %v805 = vld [vmem:[%s5 + $0x38] sm:$0xf]
    %v806 = vld [vmem:[%s5 + $0x3c] sm:$0xf]
    %v807 = vpack.c.bf16 %v761, %v759
    %v808 = vpack.c.bf16 %v762, %v760
    %v809 = vpack.c.bf16 %v765, %v763
    %v810 = vpack.c.bf16 %v766, %v764
    %v811 = vpack.c.bf16 %v769, %v767
    %v812 = vpack.c.bf16 %v770, %v768
    %v813 = vpack.c.bf16 %v773, %v771
    %v814 = vpack.c.bf16 %v774, %v772
    %v815 = vpack.c.bf16 %v777, %v775
    %v816 = vpack.c.bf16 %v778, %v776
    %v817 = vpack.c.bf16 %v781, %v779
    %v818 = vpack.c.bf16 %v782, %v780
    %v819 = vpack.c.bf16 %v785, %v783
    %v820 = vpack.c.bf16 %v786, %v784
    %v821 = vpack.c.bf16 %v789, %v787
    %v822 = vpack.c.bf16 %v790, %v788
    %v823 = vld [vmem:[%s6] sm:$0xff]
    %v824 = vld [vmem:[%s6 + $0x8] sm:$0xff]
    %v825 = vld [vmem:[%s6 + $0x10] sm:$0xff]
    %v826 = vld [vmem:[%s6 + $0x18] sm:$0xff]
    %v827 = vld [vmem:[%s6 + $0x20] sm:$0xff]
    %v828 = vld [vmem:[%s6 + $0x28] sm:$0xff]
    %v829 = vld [vmem:[%s6 + $0x30] sm:$0xff]
    %v830 = vld [vmem:[%s6 + $0x38] sm:$0xff]
    %v831 = vld [vmem:[%s6 + $0x40] sm:$0xff]
    %v832 = vld [vmem:[%s6 + $0x48] sm:$0xff]
    %v833 = vld [vmem:[%s6 + $0x50] sm:$0xff]
    %v834 = vld [vmem:[%s6 + $0x58] sm:$0xff]
    %v835 = vld [vmem:[%s6 + $0x60] sm:$0xff]
    %v836 = vld [vmem:[%s6 + $0x68] sm:$0xff]
    %v837 = vld [vmem:[%s6 + $0x70] sm:$0xff]
    %v838 = vld [vmem:[%s6 + $0x78] sm:$0xff]
    %840 = vset.pattern.permute.xlu0 0
    %841 = vperm.xlu0 %840, %v823
    %v842 = vpop.permute.xlu0 %841
    %845 = vset.pattern.permute.xlu0 0
    %846 = vperm.xlu0 %845, %v824
    %v847 = vpop.permute.xlu0 %846
    %850 = vset.pattern.permute.xlu0 0
    %851 = vperm.xlu0 %850, %v825
    %v852 = vpop.permute.xlu0 %851
    %855 = vset.pattern.permute.xlu0 0
    %856 = vperm.xlu0 %855, %v826
    %v857 = vpop.permute.xlu0 %856
    %860 = vset.pattern.permute.xlu0 0
    %861 = vperm.xlu0 %860, %v827
    %v862 = vpop.permute.xlu0 %861
    %865 = vset.pattern.permute.xlu0 0
    %866 = vperm.xlu0 %865, %v828
    %v867 = vpop.permute.xlu0 %866
    %870 = vset.pattern.permute.xlu0 0
    %871 = vperm.xlu0 %870, %v829
    %v872 = vpop.permute.xlu0 %871
    %875 = vset.pattern.permute.xlu0 0
    %876 = vperm.xlu0 %875, %v830
    %v877 = vpop.permute.xlu0 %876
    %880 = vset.pattern.permute.xlu0 0
    %881 = vperm.xlu0 %880, %v831
    %v882 = vpop.permute.xlu0 %881
    %885 = vset.pattern.permute.xlu0 0
    %886 = vperm.xlu0 %885, %v832
    %v887 = vpop.permute.xlu0 %886
    %890 = vset.pattern.permute.xlu0 0
    %891 = vperm.xlu0 %890, %v833
    %v892 = vpop.permute.xlu0 %891
    %895 = vset.pattern.permute.xlu0 0
    %896 = vperm.xlu0 %895, %v834
    %v897 = vpop.permute.xlu0 %896
    %900 = vset.pattern.permute.xlu0 0
    %901 = vperm.xlu0 %900, %v835
    %v902 = vpop.permute.xlu0 %901
    %905 = vset.pattern.permute.xlu0 0
    %906 = vperm.xlu0 %905, %v836
    %v907 = vpop.permute.xlu0 %906
    %910 = vset.pattern.permute.xlu0 0
    %911 = vperm.xlu0 %910, %v837
    %v912 = vpop.permute.xlu0 %911
    %915 = vset.pattern.permute.xlu0 0
    %916 = vperm.xlu0 %915, %v838
    %v917 = vpop.permute.xlu0 %916
    %v935 = vunpack.c.l.b16 %v791
    %v936 = vunpack.c.l.b16 %v792
    %v937 = vunpack.c.l.b16 %v793
    %v938 = vunpack.c.l.b16 %v794
    %v939 = vunpack.c.l.b16 %v795
    %v940 = vunpack.c.l.b16 %v796
    %v941 = vunpack.c.l.b16 %v797
    %v942 = vunpack.c.l.b16 %v798
    %v943 = vunpack.c.l.b16 %v799
    %v944 = vunpack.c.l.b16 %v800
    %v945 = vunpack.c.l.b16 %v801
    %v946 = vunpack.c.l.b16 %v802
    %v947 = vunpack.c.l.b16 %v803
    %v948 = vunpack.c.l.b16 %v804
    %v949 = vunpack.c.l.b16 %v805
    %v950 = vunpack.c.l.b16 %v806
    %v951 = vpack.c.b16 %v936, %v935
    %v952 = vpack.c.b16 %v938, %v937
    %v953 = vpack.c.b16 %v940, %v939
    %v954 = vpack.c.b16 %v942, %v941
    %v955 = vpack.c.b16 %v944, %v943
    %v956 = vpack.c.b16 %v946, %v945
    %v957 = vpack.c.b16 %v948, %v947
    %v958 = vpack.c.b16 %v950, %v949
    %967 = vmatprep.subr.bf16.mxu0 %v808
    %968 = vmatpush1.bf16.msra.mxu0 %v807
    %969 = vmatprep.subr.bf16.mxu0 %v810
    %970 = vmatpush1.bf16.msra.mxu0 %v809
    %971 = vmatprep.subr.bf16.mxu0 %v812
    %972 = vmatpush1.bf16.msra.mxu0 %v811
    %973 = vmatprep.subr.bf16.mxu0 %v814
    %974 = vmatpush1.bf16.msra.mxu0 %v813
    %975 = vmatprep.subr.bf16.mxu0 %v816
    %976 = vmatpush1.bf16.msra.mxu0 %v815
    %977 = vmatprep.subr.bf16.mxu0 %v818
    %978 = vmatpush1.bf16.msra.mxu0 %v817
    %979 = vmatprep.subr.bf16.mxu0 %v820
    %980 = vmatpush1.bf16.msra.mxu0 %v819
    %981 = vmatprep.subr.bf16.mxu0 %v822
    %982 = vmatpush1.bf16.msra.mxu0 %v821
    %983 = vmatprep.subr.bf16.mxu0 0
    %984 = vmatpush1.bf16.msra.mxu0 0
    %985 = vmatprep.subr.bf16.mxu0 0
    %986 = vmatpush1.bf16.msra.mxu0 0
    %987 = vmatprep.subr.bf16.mxu0 0
    %988 = vmatpush1.bf16.msra.mxu0 0
    %989 = vmatprep.subr.bf16.mxu0 0
    %990 = vmatpush1.bf16.msra.mxu0 0
    %991 = vmatprep.subr.bf16.mxu0 0
    %992 = vmatpush1.bf16.msra.mxu0 0
    %993 = vmatprep.subr.bf16.mxu0 0
    %994 = vmatpush1.bf16.msra.mxu0 0
    %995 = vmatprep.subr.bf16.mxu0 0
    %996 = vmatpush1.bf16.msra.mxu0 0
    %997 = vmatprep.subr.bf16.mxu0 0
    %998 = vmatpush1.bf16.msra.mxu0 0
    %999 = vmatprep.mubr.bf16.mxu0 0
    %1000 = vmatmul.mubr.bf16.gmra.mrb[0].mxu0 %v951
    %v1001 = vpop.f32.mrb[0].mxu0
    %v1002 = vadd.f32 %v842, %v1001
    %v1003 = vpop.f32.mrb[0].mxu0
    %v1004 = vadd.f32 %v842, %v1003
    %v1005 = vpop.f32.mrb[0].mxu0
    %v1006 = vadd.f32 %v847, %v1005
    %v1007 = vpop.f32.mrb[0].mxu0
    %v1008 = vadd.f32 %v847, %v1007
    %1009 = vmatprep.mubr.bf16.mxu0 0
    %1010 = vmatmul.mubr.bf16.gmra.mrb[0].mxu0 %v952
    %v1011 = vpop.f32.mrb[0].mxu0
    %v1012 = vadd.f32 %v852, %v1011
    %v1013 = vpop.f32.mrb[0].mxu0
    %v1014 = vadd.f32 %v852, %v1013
    %v1015 = vpop.f32.mrb[0].mxu0
    %v1016 = vadd.f32 %v857, %v1015
    %v1017 = vpop.f32.mrb[0].mxu0
    %v1018 = vadd.f32 %v857, %v1017
    %1019 = vmatprep.mubr.bf16.mxu0 0
    %1020 = vmatmul.mubr.bf16.gmra.mrb[0].mxu0 %v953
    %v1021 = vpop.f32.mrb[0].mxu0
    %v1022 = vadd.f32 %v862, %v1021
    %v1023 = vpop.f32.mrb[0].mxu0
    %v1024 = vadd.f32 %v862, %v1023
    %v1025 = vpop.f32.mrb[0].mxu0
    %v1026 = vadd.f32 %v867, %v1025
    %v1027 = vpop.f32.mrb[0].mxu0
    %v1028 = vadd.f32 %v867, %v1027
    %1029 = vmatprep.mubr.bf16.mxu0 0
    %1030 = vmatmul.mubr.bf16.gmra.mrb[0].mxu0 %v954
    %v1031 = vpop.f32.mrb[0].mxu0
    %v1032 = vadd.f32 %v872, %v1031
    %v1033 = vpop.f32.mrb[0].mxu0
    %v1034 = vadd.f32 %v872, %v1033
    %v1035 = vpop.f32.mrb[0].mxu0
    %v1036 = vadd.f32 %v877, %v1035
    %v1037 = vpop.f32.mrb[0].mxu0
    %v1038 = vadd.f32 %v877, %v1037
    %1039 = vmatprep.mubr.bf16.mxu0 0
    %1040 = vmatmul.mubr.bf16.gmra.mrb[0].mxu0 %v955
    %v1041 = vpop.f32.mrb[0].mxu0
    %v1042 = vadd.f32 %v882, %v1041
    %v1043 = vpop.f32.mrb[0].mxu0
    %v1044 = vadd.f32 %v882, %v1043
    %v1045 = vpop.f32.mrb[0].mxu0
    %v1046 = vadd.f32 %v887, %v1045
    %v1047 = vpop.f32.mrb[0].mxu0
    %v1048 = vadd.f32 %v887, %v1047
    %1049 = vmatprep.mubr.bf16.mxu0 0
    %1050 = vmatmul.mubr.bf16.gmra.mrb[0].mxu0 %v956
    %v1051 = vpop.f32.mrb[0].mxu0
    %v1052 = vadd.f32 %v892, %v1051
    %v1053 = vpop.f32.mrb[0].mxu0
    %v1054 = vadd.f32 %v892, %v1053
    %v1055 = vpop.f32.mrb[0].mxu0
    %v1056 = vadd.f32 %v897, %v1055
    %v1057 = vpop.f32.mrb[0].mxu0
    %v1058 = vadd.f32 %v897, %v1057
    %1059 = vmatprep.mubr.bf16.mxu0 0
    %1060 = vmatmul.mubr.bf16.gmra.mrb[0].mxu0 %v957
    %v1061 = vpop.f32.mrb[0].mxu0
    %v1062 = vadd.f32 %v902, %v1061
    %v1063 = vpop.f32.mrb[0].mxu0
    %v1064 = vadd.f32 %v902, %v1063
    %v1065 = vpop.f32.mrb[0].mxu0
    %v1066 = vadd.f32 %v907, %v1065
    %v1067 = vpop.f32.mrb[0].mxu0
    %v1068 = vadd.f32 %v907, %v1067
    %1069 = vmatprep.mubr.bf16.mxu0 0
    %1070 = vmatmul.mubr.bf16.gmra.mrb[0].mxu0 %v958
    %v1071 = vpop.f32.mrb[0].mxu0
    %v1072 = vadd.f32 %v912, %v1071
    %v1073 = vpop.f32.mrb[0].mxu0
    %v1074 = vadd.f32 %v912, %v1073
    %v1075 = vpop.f32.mrb[0].mxu0
    %v1076 = vadd.f32 %v917, %v1075
    %v1077 = vpop.f32.mrb[0].mxu0
    %v1078 = vadd.f32 %v917, %v1077
    %1079 = vdwg.mxu0
    %v1080 = vtanh.pop %v1002
    %v1081 = vtanh.pop %v1004
    %v1082 = vtanh.pop %v1006
    %v1083 = vtanh.pop %v1008
    %v1084 = vtanh.pop %v1012
    %v1085 = vtanh.pop %v1014
    %v1086 = vtanh.pop %v1016
    %v1087 = vtanh.pop %v1018
    %v1088 = vtanh.pop %v1022
    %v1089 = vtanh.pop %v1024
    %v1090 = vtanh.pop %v1026
    %v1091 = vtanh.pop %v1028
    %v1092 = vtanh.pop %v1032
    %v1093 = vtanh.pop %v1034
    %v1094 = vtanh.pop %v1036
    %v1095 = vtanh.pop %v1038
    %v1096 = vtanh.pop %v1042
    %v1097 = vtanh.pop %v1044
    %v1098 = vtanh.pop %v1046
    %v1099 = vtanh.pop %v1048
    %v1100 = vtanh.pop %v1052
    %v1101 = vtanh.pop %v1054
    %v1102 = vtanh.pop %v1056
    %v1103 = vtanh.pop %v1058
    %v1104 = vtanh.pop %v1062
    %v1105 = vtanh.pop %v1064
    %v1106 = vtanh.pop %v1066
    %v1107 = vtanh.pop %v1068
    %v1108 = vtanh.pop %v1072
    %v1109 = vtanh.pop %v1074
    %v1110 = vtanh.pop %v1076
    %v1111 = vtanh.pop %v1078
    %v1112 = vld [vmem:[%s7] sm:$0xff]
    %v1113 = vld [vmem:[%s7 + $0x8] sm:$0xff]
    %v1114 = vld [vmem:[%s7 + $0x10] sm:$0xff]
    %v1115 = vld [vmem:[%s7 + $0x18] sm:$0xff]
    %v1116 = vld [vmem:[%s7 + $0x20] sm:$0xff]
    %v1117 = vld [vmem:[%s7 + $0x28] sm:$0xff]
    %v1118 = vld [vmem:[%s7 + $0x30] sm:$0xff]
    %v1119 = vld [vmem:[%s7 + $0x38] sm:$0xff]
    %v1120 = vld [vmem:[%s7 + $0x40] sm:$0xff]
    %v1121 = vld [vmem:[%s7 + $0x48] sm:$0xff]
    %v1122 = vld [vmem:[%s7 + $0x50] sm:$0xff]
    %v1123 = vld [vmem:[%s7 + $0x58] sm:$0xff]
    %v1124 = vld [vmem:[%s7 + $0x60] sm:$0xff]
    %v1125 = vld [vmem:[%s7 + $0x68] sm:$0xff]
    %v1126 = vld [vmem:[%s7 + $0x70] sm:$0xff]
    %v1127 = vld [vmem:[%s7 + $0x78] sm:$0xff]
    %1129 = vset.pattern.permute.xlu0 0
    %1130 = vperm.xlu0 %1129, %v1112
    %v1131 = vpop.permute.xlu0 %1130
    %1134 = vset.pattern.permute.xlu0 0
    %1135 = vperm.xlu0 %1134, %v1113
    %v1136 = vpop.permute.xlu0 %1135
    %1139 = vset.pattern.permute.xlu0 0
    %1140 = vperm.xlu0 %1139, %v1114
    %v1141 = vpop.permute.xlu0 %1140
    %1144 = vset.pattern.permute.xlu0 0
    %1145 = vperm.xlu0 %1144, %v1115
    %v1146 = vpop.permute.xlu0 %1145
    %1149 = vset.pattern.permute.xlu0 0
    %1150 = vperm.xlu0 %1149, %v1116
    %v1151 = vpop.permute.xlu0 %1150
    %1154 = vset.pattern.permute.xlu0 0
    %1155 = vperm.xlu0 %1154, %v1117
    %v1156 = vpop.permute.xlu0 %1155
    %1159 = vset.pattern.permute.xlu0 0
    %1160 = vperm.xlu0 %1159, %v1118
    %v1161 = vpop.permute.xlu0 %1160
    %1164 = vset.pattern.permute.xlu0 0
    %1165 = vperm.xlu0 %1164, %v1119
    %v1166 = vpop.permute.xlu0 %1165
    %1169 = vset.pattern.permute.xlu0 0
    %1170 = vperm.xlu0 %1169, %v1120
    %v1171 = vpop.permute.xlu0 %1170
    %1174 = vset.pattern.permute.xlu0 0
    %1175 = vperm.xlu0 %1174, %v1121
    %v1176 = vpop.permute.xlu0 %1175
    %1179 = vset.pattern.permute.xlu0 0
    %1180 = vperm.xlu0 %1179, %v1122
    %v1181 = vpop.permute.xlu0 %1180
    %1184 = vset.pattern.permute.xlu0 0
    %1185 = vperm.xlu0 %1184, %v1123
    %v1186 = vpop.permute.xlu0 %1185
    %1189 = vset.pattern.permute.xlu0 0
    %1190 = vperm.xlu0 %1189, %v1124
    %v1191 = vpop.permute.xlu0 %1190
    %1194 = vset.pattern.permute.xlu0 0
    %1195 = vperm.xlu0 %1194, %v1125
    %v1196 = vpop.permute.xlu0 %1195
    %1199 = vset.pattern.permute.xlu0 0
    %1200 = vperm.xlu0 %1199, %v1126
    %v1201 = vpop.permute.xlu0 %1200
    %1204 = vset.pattern.permute.xlu0 0
    %1205 = vperm.xlu0 %1204, %v1127
    %v1206 = vpop.permute.xlu0 %1205
    %v1208 = vmul.f32 %v1131, %v1080
    %v1209 = vmul.f32 %v1131, %v1081
    %v1210 = vmul.f32 %v1136, %v1082
    %v1211 = vmul.f32 %v1136, %v1083
    %v1212 = vmul.f32 %v1141, %v1084
    %v1213 = vmul.f32 %v1141, %v1085
    %v1214 = vmul.f32 %v1146, %v1086
    %v1215 = vmul.f32 %v1146, %v1087
    %v1216 = vmul.f32 %v1151, %v1088
    %v1217 = vmul.f32 %v1151, %v1089
    %v1218 = vmul.f32 %v1156, %v1090
    %v1219 = vmul.f32 %v1156, %v1091
    %v1220 = vmul.f32 %v1161, %v1092
    %v1221 = vmul.f32 %v1161, %v1093
    %v1222 = vmul.f32 %v1166, %v1094
    %v1223 = vmul.f32 %v1166, %v1095
    %v1224 = vmul.f32 %v1171, %v1096
    %v1225 = vmul.f32 %v1171, %v1097
    %v1226 = vmul.f32 %v1176, %v1098
    %v1227 = vmul.f32 %v1176, %v1099
    %v1228 = vmul.f32 %v1181, %v1100
    %v1229 = vmul.f32 %v1181, %v1101
    %v1230 = vmul.f32 %v1186, %v1102
    %v1231 = vmul.f32 %v1186, %v1103
    %v1232 = vmul.f32 %v1191, %v1104
    %v1233 = vmul.f32 %v1191, %v1105
    %v1234 = vmul.f32 %v1196, %v1106
    %v1235 = vmul.f32 %v1196, %v1107
    %v1236 = vmul.f32 %v1201, %v1108
    %v1237 = vmul.f32 %v1201, %v1109
    %v1238 = vmul.f32 %v1206, %v1110
    %v1239 = vmul.f32 %v1206, %v1111
    %v1240 = vadd.f32 %v1208, %v1210
    %v1241 = vadd.f32 %v1240, %v1212
    %v1242 = vadd.f32 %v1241, %v1214
    %v1243 = vadd.f32 %v1242, %v1216
    %v1244 = vadd.f32 %v1243, %v1218
    %v1245 = vadd.f32 %v1244, %v1220
    %v1246 = vadd.f32 %v1245, %v1222
    %v1247 = vadd.f32 %v1246, %v1224
    %v1248 = vadd.f32 %v1247, %v1226
    %v1249 = vadd.f32 %v1248, %v1228
    %v1250 = vadd.f32 %v1249, %v1230
    %v1251 = vadd.f32 %v1250, %v1232
    %v1252 = vadd.f32 %v1251, %v1234
    %v1253 = vadd.f32 %v1252, %v1236
    %v1254 = vadd.f32 %v1253, %v1238
    %v1255 = vrot.slane %v1254, 4
    %v1256 = vadd.f32 %v1254, %v1255
    %v1257 = vrot.slane %v1256, 2
    %v1258 = vadd.f32 %v1256, %v1257
    %v1259 = vrot.slane %v1258, 1
    %v1260 = vadd.f32 %v1258, %v1259
    %v1261 = vadd.f32 %v1209, %v1211
    %v1262 = vadd.f32 %v1261, %v1213
    %v1263 = vadd.f32 %v1262, %v1215
    %v1264 = vadd.f32 %v1263, %v1217
    %v1265 = vadd.f32 %v1264, %v1219
    %v1266 = vadd.f32 %v1265, %v1221
    %v1267 = vadd.f32 %v1266, %v1223
    %v1268 = vadd.f32 %v1267, %v1225
    %v1269 = vadd.f32 %v1268, %v1227
    %v1270 = vadd.f32 %v1269, %v1229
    %v1271 = vadd.f32 %v1270, %v1231
    %v1272 = vadd.f32 %v1271, %v1233
    %v1273 = vadd.f32 %v1272, %v1235
    %v1274 = vadd.f32 %v1273, %v1237
    %v1275 = vadd.f32 %v1274, %v1239
    %v1276 = vrot.slane %v1275, 4
    %v1277 = vadd.f32 %v1275, %v1276
    %v1278 = vrot.slane %v1277, 2
    %v1279 = vadd.f32 %v1277, %v1278
    %v1280 = vrot.slane %v1279, 1
    %v1281 = vadd.f32 %v1279, %v1280
    %v1282 = vld [vmem:[#allocation2] sm:$0x1]
    %1284 = vset.pattern.permute.xlu0 0
    %1285 = vperm.xlu0 %1284, %v1282
    %v1286 = vpop.permute.xlu0 %1285
    %v1288 = vlaneseq
    %v1289 = vshrl.u32 %v1288, 7
    %v1290 = vsub.s32 0, %v1289
    %v1291 = vrot.slane %v1286, %v1290
    %v1292 = vadd.f32 %v1260, %v1291
    %v1293 = vadd.f32 %v1281, %v1291
    %v1296 = vcombine.low %v1292, %v1293
    %v1298 = vunpack.c.l.s4 1966171168
    %v1299 = vunpack.c.0.s8 %v1298
    %v1300 = vlaneseq
    %v1301 = vshrl.u32 %v1300, 7
    %v1302 = vsub.s32 %v1299, %v1301
    %v1303 = vrot.slane %v1296, %v1302
    %v1305 = vunpack.c.l.s4 1966171168
    %v1306 = vunpack.c.0.s8 %v1305
    %v1307 = vlaneseq
    %v1308 = vshrl.u32 %v1307, 7
    %v1309 = vsub.s32 %v1306, %v1308
    %v1310 = vrot.slane %v1303, %v1309
    %v1312 = vlaneseq
    %vm1313 = vcmp.ge.s32.totalorder %v1312, 0
    %vm1314 = vcmp.lt.s32.totalorder %v1312, 256
    %vm1315 = vmand %vm1313, %vm1314
    %1316 = vst.msk [vmem:[#allocation3] sm:$0x3] %vm1315, %v1310
    // Predicated region
    $region38: #{tpu_custom_call.1} parent=1 // pred_check
      _
    $region39: #{tpu_custom_call.1} parent=1 // pred_check_branch
      %1318 = sbr.rel (0) target = $region41
    $region40: #{tpu_custom_call.1} parent=1 // pred_region
      %s1320 = ssub.s32 32, 32
      %1321 = vsyncadd [#allocation4], %s1320
      %s1323 = sshll.u32 [#allocation3], 4
      %s1324 = int_to_ptr.vmem [resolvable:$true] %s1323
      %1326 = dma.vmem_to_hbm [thread:$0]  %s1324, 32, %s9, [#allocation4]
    $region41: #{tpu_custom_call.1} parent=1 // pred_fallthru
      _
    // Predicated region
    $region42: #{tpu_custom_call.1} parent=1 // pred_check
      _
    $region43: #{tpu_custom_call.1} parent=1 // pred_check_branch
      %1328 = sbr.rel (0) target = $region45
    $region44: #{tpu_custom_call.1} parent=1 // pred_region
      %1329 = dma.done [#allocation4], 32
    $region45: #{tpu_custom_call.1} parent=1 // pred_fallthru
      _
    %1330 = vsyncpa [#allocation4], 1

</llo_original>
